<compile_context>
chip_gen: v7x
topology: tpu7x:2x2x1
jax: 0.10.0
libtpu: 0.0.40
codegen_flags: <defaults>
</compile_context>

<pallas_src>
import functools

import jax
import jax.numpy as jnp
from jax import lax
from jax.experimental import pallas as pl
from jax.experimental.pallas import tpu as pltpu


def _round_up(x, m):
    return ((x + m - 1) // m) * m


# ----------------------------- Pallas kernel -----------------------------

def _yolo_head_kernel(p_ref, mul_ref, add_ref, io_ref):
    """YOLO inference transform on a lane-dense (no, M) layout.

        rows 0:2 : (sigmoid(p) + grid_xy) * stride  ==  sigmoid(p)*stride + grid_xy*stride
        rows 2:4 :  exp(p) * anchor_wh * stride     ==  exp(p) * anchors
        rows 4:  :  sigmoid(p)

    Whole-block sigmoid/exp on the EUP, row selection via broadcasted iota + where
    (no sublane slicing / concatenation), single fused multiply-add, one lane-dense store.
    The per-row/per-cell multiplier (`mul`) and additive (`add`) terms are precomputed at
    param-prep time.
    """
    p = p_ref[...]
    sig = jax.nn.sigmoid(p)
    e = jnp.exp(p)
    row = lax.broadcasted_iota(jnp.int32, p.shape, 0)
    is_wh = jnp.logical_and(row >= 2, row < 4)
    io_ref[...] = jnp.where(is_wh, e, sig) * mul_ref[...] + add_ref[...]


def _run_yolo_head(p_t, mul_t, add_t):
    """Single Pallas call over the (possibly concatenated multi-scale) cell axis."""
    no, M = p_t.shape
    if M <= 1024:
        Mp = _round_up(M, 128)
        tl = Mp                       # one grid step: tiny heads are launch-latency bound
    else:
        tl = 1024                     # >1 block on a "parallel" axis (v7x megacore shards)
        Mp = _round_up(M, tl)
    if Mp != M:
        pad = ((0, 0), (0, Mp - M))
        p_t = jnp.pad(p_t, pad)
        mul_t = jnp.pad(mul_t, pad)
        add_t = jnp.pad(add_t, pad)

    io_t = pl.pallas_call(
        _yolo_head_kernel,
        out_shape=jax.ShapeDtypeStruct((no, Mp), jnp.float32),
        grid_spec=pltpu.PrefetchScalarGridSpec(
            num_scalar_prefetch=0,
            grid=(Mp // tl,),
            in_specs=[pl.BlockSpec((no, tl), lambda i: (0, i)),
                      pl.BlockSpec((no, tl), lambda i: (0, i)),
                      pl.BlockSpec((no, tl), lambda i: (0, i))],
            out_specs=pl.BlockSpec((no, tl), lambda i: (0, i)),
        ),
        compiler_params=pltpu.CompilerParams(dimension_semantics=("parallel",)),
    )(p_t, mul_t, add_t)
    return io_t[:, :M]


# ----------------------------- param-prep (create_grids equivalent) -----------------------------

def make_yolo_prep(anchors, nc, stride, bs, ny, nx):
    """Precompute everything that depends only on (anchors, stride, grid size, batch):
    the per-cell multiplicative and additive terms of the YOLO inference transform,
    already in the lane-dense (no, M) layout.  This replaces the per-forward
    meshgrid / broadcast / stack / pad glue of the previous version."""
    anchors = jnp.asarray(anchors, jnp.float32)
    na = int(anchors.shape[0])
    no = nc + 5
    M = bs * na * ny * nx

    gy, gx = jnp.meshgrid(jnp.arange(ny, dtype=jnp.float32),
                          jnp.arange(nx, dtype=jnp.float32), indexing='ij')
    gx_f = jnp.broadcast_to(gx[None, None], (bs, na, ny, nx)).reshape(M)
    gy_f = jnp.broadcast_to(gy[None, None], (bs, na, ny, nx)).reshape(M)
    # anchor_vec = anchors / stride;  io[...,2:4] = exp(p) * anchor_vec * stride = exp(p)*anchors
    aw_f = jnp.broadcast_to(anchors[None, :, None, None, 0], (bs, na, ny, nx)).reshape(M)
    ah_f = jnp.broadcast_to(anchors[None, :, None, None, 1], (bs, na, ny, nx)).reshape(M)

    s = float(stride)
    ones = jnp.ones((M,), jnp.float32)
    zeros = jnp.zeros((M,), jnp.float32)
    mul_rows = [ones * s, ones * s, aw_f, ah_f] + [ones] * (no - 4)
    add_rows = [gx_f * s, gy_f * s, zeros, zeros] + [zeros] * (no - 4)
    mul_t = jnp.stack(mul_rows, axis=0)            # (no, M)
    add_t = jnp.stack(add_rows, axis=0)            # (no, M)

    return {'mul': mul_t, 'add': add_t, 'na': na, 'no': no, 'nc': nc,
            'bs': bs, 'ny': ny, 'nx': nx, 'stride': s, 'M': M}


# ----------------------------- forward (eval branch of YOLOLayer.forward) -----------------------------

def yolo_forward_fused(preps, ps):
    """Inference forward for one or more YOLOLayer instances, fused into one pallas_call.

    Each p is the raw NCHW head tensor (bs, na*no, ny, nx) like the PyTorch module.
    Returns a list of (io.view(bs, -1, no), p_perm) matching YOLOLayer.forward eval output.
    """
    p_ts, p_perms = [], []
    for prep, p in zip(preps, ps):
        bs, na, no, ny, nx = prep['bs'], prep['na'], prep['no'], prep['ny'], prep['nx']
        p5 = p.reshape(bs, na, no, ny, nx)
        p_perm = jnp.transpose(p5, (0, 1, 3, 4, 2)).astype(jnp.float32)   # (bs,na,ny,nx,no)
        p_perms.append(p_perm)
        p_ts.append(p_perm.reshape(prep['M'], no).T)                      # (no, M_i) lane-dense

    if len(preps) > 1:
        p_cat = jnp.concatenate(p_ts, axis=1)
        mul_cat = jnp.concatenate([pr['mul'] for pr in preps], axis=1)
        add_cat = jnp.concatenate([pr['add'] for pr in preps], axis=1)
    else:
        p_cat, mul_cat, add_cat = p_ts[0], preps[0]['mul'], preps[0]['add']

    io_cat = _run_yolo_head(p_cat, mul_cat, add_cat)                      # (no, sum M_i)

    outs, off = [], 0
    for prep, p_perm in zip(preps, p_perms):
        M, bs, no = prep['M'], prep['bs'], prep['no']
        io = io_cat[:, off:off + M].T.reshape(bs, -1, no)                 # (bs, na*ny*nx, no)
        outs.append((io, p_perm))
        off += M
    return outs


def yolo_layer_forward(prep, p):
    """Single YOLOLayer eval-mode forward: (io.view(bs,-1,no), p_perm)."""
    return yolo_forward_fused([prep], [p])[0]


# ----------------------------- pure-JAX reference (mirrors the PyTorch eval branch) -----------------------------

def yolo_reference(p, anchors, nc, stride):
    anchors = jnp.asarray(anchors, jnp.float32)
    na = anchors.shape[0]
    no = nc + 5
    bs, _, ny, nx = p.shape
    pp = jnp.transpose(p.reshape(bs, na, no, ny, nx), (0, 1, 3, 4, 2)).astype(jnp.float32)
    gy, gx = jnp.meshgrid(jnp.arange(ny, dtype=jnp.float32),
                          jnp.arange(nx, dtype=jnp.float32), indexing='ij')
    grid = jnp.stack((gx, gy), axis=-1).reshape(1, 1, ny, nx, 2)
    anchor_wh = (anchors / stride).reshape(1, na, 1, 1, 2)
    xy = (jax.nn.sigmoid(pp[..., :2]) + grid) * stride
    wh = jnp.exp(pp[..., 2:4]) * anchor_wh * stride
    conf = jax.nn.sigmoid(pp[..., 4:])
    io = jnp.concatenate([xy, wh, conf], axis=-1).reshape(bs, -1, no)
    return io, pp


# ----------------------------- main -----------------------------

if __name__ == "__main__":
    nc = 2
    no = nc + 5
    na = 3
    bs, img = 2, 64
    # The three YOLO scales MDENet instantiates this module with: 3 anchors each, strides 32/16/8.
    all_anchors = jnp.array([[10, 13], [16, 30], [33, 23],
                             [30, 61], [62, 45], [59, 119],
                             [116, 90], [156, 198], [373, 326]], jnp.float32)
    strides = (32, 16, 8)

    keys = jax.random.split(jax.random.PRNGKey(0), len(strides))
    ps, preps = [], []
    for i, s in enumerate(strides):
        ny = nx = img // s
        anchors = all_anchors[3 * i:3 * (i + 1)]
        ps.append(jax.random.normal(keys[i], (bs, na * no, ny, nx), jnp.float32))
        preps.append(make_yolo_prep(anchors, nc, s, bs, ny, nx))

    fwd = jax.jit(lambda *p_in: yolo_forward_fused(preps, list(p_in)))
    outs = fwd(*ps)
    jax.block_until_ready(outs)

    # verify each YOLOLayer instance against the pure-JAX reference of the PyTorch eval branch
    for i, ((io, p_perm), p_in, s) in enumerate(zip(outs, ps, strides)):
        ny = nx = img // s
        anchors = all_anchors[3 * i:3 * (i + 1)]
        io_ref, p_ref = yolo_reference(p_in, anchors, nc, s)
        assert io.shape == (bs, na * ny * nx, no)
        assert p_perm.shape == (bs, na, ny, nx, no)
        assert jnp.allclose(p_perm, p_ref, atol=1e-6), f"p mismatch at scale {i}"
        assert jnp.allclose(io, io_ref, rtol=1e-3, atol=1e-3), (
            f"io mismatch at scale {i}: {float(jnp.max(jnp.abs(io - io_ref)))}")

    print("KERNEL_OK")
</pallas_src>

<mosaic_0001>
module attributes {stable_mosaic.version = 11 : i64} {
  func.func @_yolo_head_kernel(%arg0: i32, %arg1: memref<7x512xf32, #tpu.memory_space<vmem>>, %arg2: memref<7x512xf32, #tpu.memory_space<vmem>>, %arg3: memref<7x512xf32, #tpu.memory_space<vmem>>, %arg4: memref<7x512xf32, #tpu.memory_space<vmem>>) attributes {dimension_semantics = [#tpu.dimension_semantics<parallel>], iteration_bounds = array<i64: 1>, scalar_prefetch = 0 : i64, scratch_operands = 0 : i64, tpu.core_type = #tpu.core_type<tc>, window_params = [{transform_indices = @transform_0, window_bounds = array<i64: 7, 512>}, {transform_indices = @transform_1, window_bounds = array<i64: 7, 512>}, {transform_indices = @transform_2, window_bounds = array<i64: 7, 512>}, {transform_indices = @transform_3, window_bounds = array<i64: 7, 512>}]} {
    %c0 = arith.constant 0 : index
    %c0_0 = arith.constant 0 : index
    %0 = vector.load %arg1[%c0, %c0_0] : memref<7x512xf32, #tpu.memory_space<vmem>>, vector<7x512xf32>
    %1 = arith.negf %0 : vector<7x512xf32>
    %2 = math.exp %1 : vector<7x512xf32>
    %cst = arith.constant 1.000000e+00 : f32
    %3 = vector.broadcast %cst : f32 to vector<7x512xf32>
    %4 = arith.addf %3, %2 : vector<7x512xf32>
    %5 = arith.divf %3, %4 : vector<7x512xf32>
    %6 = math.exp %0 : vector<7x512xf32>
    %7 = tpu.iota {dimensions = array<i32: 0>} : vector<7x512xi32>
    %c2_i32 = arith.constant 2 : i32
    %8 = vector.broadcast %c2_i32 : i32 to vector<7x512xi32>
    %9 = arith.cmpi sge, %7, %8 : vector<7x512xi32>
    %c4_i32 = arith.constant 4 : i32
    %10 = vector.broadcast %c4_i32 : i32 to vector<7x512xi32>
    %11 = arith.cmpi slt, %7, %10 : vector<7x512xi32>
    %12 = arith.andi %9, %11 : vector<7x512xi1>
    %13 = arith.select %12, %6, %5 : vector<7x512xi1>, vector<7x512xf32>
    %c0_1 = arith.constant 0 : index
    %c0_2 = arith.constant 0 : index
    %14 = vector.load %arg2[%c0_1, %c0_2] : memref<7x512xf32, #tpu.memory_space<vmem>>, vector<7x512xf32>
    %15 = arith.mulf %13, %14 : vector<7x512xf32>
    %c0_3 = arith.constant 0 : index
    %c0_4 = arith.constant 0 : index
    %16 = vector.load %arg3[%c0_3, %c0_4] : memref<7x512xf32, #tpu.memory_space<vmem>>, vector<7x512xf32>
    %17 = arith.addf %15, %16 : vector<7x512xf32>
    %c0_5 = arith.constant 0 : index
    %c0_6 = arith.constant 0 : index
    %18 = vector.load %arg4[%c0_5, %c0_6] : memref<7x512xf32, #tpu.memory_space<vmem>>, vector<7x512xf32>
    tpu.vector_store %arg4[%c0_5, %c0_6], %17 {strides = array<i32>} : memref<7x512xf32, #tpu.memory_space<vmem>>, vector<7x512xf32>,
    return
  }
  func.func @transform_0(%arg0: i32) -> (i32, i32) {
    %c0_i32 = arith.constant 0 : i32
    %c0_i32_0 = arith.constant 0 : i32
    return %c0_i32, %arg0 : i32, i32
  }
  func.func @transform_1(%arg0: i32) -> (i32, i32) {
    %c0_i32 = arith.constant 0 : i32
    %c0_i32_0 = arith.constant 0 : i32
    return %c0_i32, %arg0 : i32, i32
  }
  func.func @transform_2(%arg0: i32) -> (i32, i32) {
    %c0_i32 = arith.constant 0 : i32
    %c0_i32_0 = arith.constant 0 : i32
    return %c0_i32, %arg0 : i32, i32
  }
  func.func @transform_3(%arg0: i32) -> (i32, i32) {
    %c0_i32 = arith.constant 0 : i32
    %c0_i32_0 = arith.constant 0 : i32
    return %c0_i32, %arg0 : i32, i32
  }
}

</mosaic_0001>

<llo_original>
// kernel: _lambda_.1
$region0: #{_lambda_.1}
  #allocation0 [shape = 'u32[]', space=smem, size = 0x4, offset = 0x4, fixed_abs, tag = 'smem constant byte address 0x4 - core index']
  #allocation1 [shape = 'u32[144,128]{1,0:T(1,128)}', space=vmem, size = 0x12000, scoped, tag = 'internal scratch']
  %s0 = inlined_call_operand.vmem [shape: f32[7,512], index: 0, kind: input, shape index: {}]
  %s1 = inlined_call_operand.vmem [shape: f32[7,512], index: 1, kind: input, shape index: {}]
  %s2 = inlined_call_operand.vmem [shape: f32[7,512], index: 2, kind: input, shape index: {}]
  %s3 = inlined_call_operand.vmem [shape: f32[7,512], index: 3, kind: output, shape index: {}]
  %s4 = sld [smem:[#allocation0]]
  $region22: #{_lambda_.1} parent=0
    _
  %s6 = ssub.s32 1, %s4
  %s7 = scalar_select 0, %s6, %s4
  // Predicated region
  $region2: #{_lambda_.1} parent=0 // pred_check
    _
  $region3: #{_lambda_.1} parent=0 // pred_check_branch
    %9 = sbr.rel (0) target = $region5
  $region4: #{_lambda_.1} parent=0 // pred_region
    _
  $region5: #{_lambda_.1} parent=0 // pred_fallthru
    _
  // Predicated region
  $region6: #{_lambda_.1} parent=0 // pred_check
    _
  $region7: #{_lambda_.1} parent=0 // pred_check_branch
    %11 = sbr.rel (0) target = $region9
  $region8: #{_lambda_.1} parent=0 // pred_region
    _
  $region9: #{_lambda_.1} parent=0 // pred_fallthru
    _
  // Predicated region
  $region10: #{_lambda_.1} parent=0 // pred_check
    _
  $region11: #{_lambda_.1} parent=0 // pred_check_branch
    %13 = sbr.rel (0) target = $region13
  $region12: #{_lambda_.1} parent=0 // pred_region
    _
  $region13: #{_lambda_.1} parent=0 // pred_fallthru
    _
  %v14 = vld [vmem:[%s0] sm:$0x7f]
  %v15 = vld [vmem:[%s0 + $0x8] sm:$0x7f]
  %v16 = vld [vmem:[%s0 + $0x10] sm:$0x7f]
  %v17 = vld [vmem:[%s0 + $0x18] sm:$0x7f]
  %v18 = vxor.u32 %v14, 2147483648
  %v19 = vxor.u32 %v15, 2147483648
  %v20 = vxor.u32 %v16, 2147483648
  %v21 = vxor.u32 %v17, 2147483648
  %v22 = vmul.f32 %v18, 1.442695
  %v23 = vpow.pop %v22
  %v24 = vmul.f32 %v19, 1.442695
  %v25 = vpow.pop %v24
  %v26 = vmul.f32 %v20, 1.442695
  %v27 = vpow.pop %v26
  %v28 = vmul.f32 %v21, 1.442695
  %v29 = vpow.pop %v28
  %v30 = vadd.f32 %v23, 1.0
  %v31 = vadd.f32 %v25, 1.0
  %v32 = vadd.f32 %v27, 1.0
  %v33 = vadd.f32 %v29, 1.0
  %v34 = vrcp.pop %v30
  %v35 = vmul.f32 1.0, %v34
  %v36 = vrcp.pop %v31
  %v37 = vmul.f32 1.0, %v36
  %v38 = vrcp.pop %v32
  %v39 = vmul.f32 1.0, %v38
  %v40 = vrcp.pop %v33
  %v41 = vmul.f32 1.0, %v40
  %v42 = vmul.f32 %v14, 1.442695
  %v43 = vpow.pop %v42
  %v44 = vmul.f32 %v15, 1.442695
  %v45 = vpow.pop %v44
  %v46 = vmul.f32 %v16, 1.442695
  %v47 = vpow.pop %v46
  %v48 = vmul.f32 %v17, 1.442695
  %v49 = vpow.pop %v48
  %v50 = vlaneseq
  %v51 = vshrl.u32 %v50, 7
  %vm52 = vcmp.ge.s32.totalorder %v51, 2
  %vm53 = vcmp.lt.s32.totalorder %v51, 4
  %vm54 = vmand %vm52, %vm53
  %v55 = vsel %vm54, %v43, %v35
  %v56 = vsel %vm54, %v45, %v37
  %v57 = vsel %vm54, %v47, %v39
  %v58 = vsel %vm54, %v49, %v41
  %v59 = vld [vmem:[%s1] sm:$0x7f]
  %v60 = vld [vmem:[%s1 + $0x8] sm:$0x7f]
  %v61 = vld [vmem:[%s1 + $0x10] sm:$0x7f]
  %v62 = vld [vmem:[%s1 + $0x18] sm:$0x7f]
  %v63 = vmul.f32 %v55, %v59
  %v64 = vmul.f32 %v56, %v60
  %v65 = vmul.f32 %v57, %v61
  %v66 = vmul.f32 %v58, %v62
  %v67 = vld [vmem:[%s2] sm:$0x7f]
  %v68 = vld [vmem:[%s2 + $0x8] sm:$0x7f]
  %v69 = vld [vmem:[%s2 + $0x10] sm:$0x7f]
  %v70 = vld [vmem:[%s2 + $0x18] sm:$0x7f]
  %v71 = vadd.f32 %v63, %v67
  %v72 = vadd.f32 %v64, %v68
  %v73 = vadd.f32 %v65, %v69
  %v74 = vadd.f32 %v66, %v70
  %75 = vst [vmem:[%s3] sm:$0x7f] %v71
  %76 = vst [vmem:[%s3 + $0x8] sm:$0x7f] %v72
  %77 = vst [vmem:[%s3 + $0x10] sm:$0x7f] %v73
  %78 = vst [vmem:[%s3 + $0x18] sm:$0x7f] %v74
  // Predicated region
  $region14: #{_lambda_.1} parent=0 // pred_check
    _
  $region15: #{_lambda_.1} parent=0 // pred_check_branch
    %80 = sbr.rel (0) target = $region17
  $region16: #{_lambda_.1} parent=0 // pred_region
    _
  $region17: #{_lambda_.1} parent=0 // pred_fallthru
    _
  // Predicated region
  $region18: #{_lambda_.1} parent=0 // pred_check
    _
  $region19: #{_lambda_.1} parent=0 // pred_check_branch
    %82 = sbr.rel (0) target = $region21
  $region20: #{_lambda_.1} parent=0 // pred_region
    _
  $region21: #{_lambda_.1} parent=0 // pred_fallthru
    _

</llo_original>
